<compile_context>
chip_gen: v5e
topology: v5e:2x2
jax: 0.10.0
libtpu: 0.0.40
codegen_flags: <defaults>
</compile_context>

<pallas_src>
import math

import jax
import jax.numpy as jnp
from jax.experimental import pallas as pl
from jax.experimental.pallas import tpu as pltpu


def _round_up(n, m):
    return ((n + m - 1) // m) * m


def mlp_kernel(x_ref, vec_ref, w2_ref, b3_ref, o_ref):
    """x_ref: (1, TB) batch-on-lanes; vec_ref: (NN, 4) packed [w1|b1|b2pad|w3pad];
    w2_ref: (NH, NN); b3_ref: (1, 1) SMEM scalar; o_ref: (1, TB)."""
    nh = w2_ref.shape[0]

    x = x_ref[...]                       # (1, TB)
    vec = vec_ref[...]                   # (NN, 4)
    w1 = vec[:, 0:1]                     # (NN, 1)
    b1 = vec[:, 1:2]                     # (NN, 1)
    b2 = vec[:nh, 2:3]                   # (NH, 1)
    w3 = vec[:nh, 3:4]                   # (NH, 1)

    # Layer 1: Linear(1, NN) + tanh  -- K=1, so plain broadcast (VPU + EUP).
    h1 = jnp.tanh(w1 * x + b1)                                   # (NN, TB)

    # Layer 2: Linear(NN, NH) + tanh -- the only real matmul (MXU).
    h2 = jnp.tanh(
        jnp.dot(w2_ref[...], h1, preferred_element_type=jnp.float32) + b2
    )                                                            # (NH, TB)

    # Output layer: Linear(NH, 1) -- N=1, weighted reduce over sublanes.
    o_ref[...] = jnp.sum(w3 * h2, axis=0, keepdims=True) + b3_ref[0, 0]


def net_forward(x, params):
    """x: (B, 1) float32 (PyTorch convention). params in torch Linear shapes."""
    w1, b1, w2, b2, w3, b3 = params
    B = x.shape[0]
    NN = w1.shape[0]
    NH = w2.shape[0]

    # Lane tile over the batch: 128 minimum, 512 for large collocation sets.
    TB = min(512, max(128, _round_up(B, 128)))
    B_pad = _round_up(B, TB)
    grid = (pl.cdiv(B_pad, TB),)

    # Batch on lanes, zero-padded to the tile boundary.
    xt = jnp.pad(x.astype(jnp.float32).reshape(1, B), ((0, 0), (0, B_pad - B)))

    # Pack the tiny column parameters into one VMEM buffer: (NN, 4).
    col = lambda v: v.astype(jnp.float32).reshape(-1, 1)
    padnn = lambda v: jnp.pad(v, ((0, NN - NH), (0, 0)))
    packed = jnp.concatenate(
        [col(w1), col(b1), padnn(col(b2)), padnn(col(w3))], axis=1
    )
    b3s = b3.astype(jnp.float32).reshape(1, 1)

    out = pl.pallas_call(
        mlp_kernel,
        out_shape=jax.ShapeDtypeStruct((1, B_pad), jnp.float32),
        grid=grid,
        in_specs=[
            pl.BlockSpec((1, TB), lambda i: (0, i)),        # x tile (lane-dense)
            pl.BlockSpec((NN, 4), lambda i: (0, 0)),        # packed small params
            pl.BlockSpec((NH, NN), lambda i: (0, 0)),       # hidden weight (resident)
            pl.BlockSpec((1, 1), lambda i: (0, 0),
                         memory_space=pltpu.MemorySpace.SMEM),  # b3 scalar
        ],
        out_specs=pl.BlockSpec((1, TB), lambda i: (0, i)),
        compiler_params=pltpu.CompilerParams(
            dimension_semantics=("parallel",)),
    )(xt, packed, w2.astype(jnp.float32), b3s)

    return out[:, :B].reshape(B, 1)


def init_params(key, NN):
    """Torch nn.Linear default init (U[-1/sqrt(fan_in), 1/sqrt(fan_in)]),
    weights stored in torch shapes (out, in)."""
    NH = NN // 2
    keys = jax.random.split(key, 6)

    def lin(kw, kb, fan_in, fan_out):
        bound = 1.0 / math.sqrt(fan_in)
        w = jax.random.uniform(kw, (fan_out, fan_in), jnp.float32, -bound, bound)
        b = jax.random.uniform(kb, (fan_out,), jnp.float32, -bound, bound)
        return w, b

    w1, b1 = lin(keys[0], keys[1], 1, NN)     # (NN, 1), (NN,)
    w2, b2 = lin(keys[2], keys[3], NN, NH)    # (NH, NN), (NH,)
    w3, b3 = lin(keys[4], keys[5], NH, 1)     # (1, NH), (1,)
    return (w1, b1, w2, b2, w3, b3)


def reference_forward(x, params):
    w1, b1, w2, b2, w3, b3 = params
    h1 = jnp.tanh(x @ w1.T + b1)
    h2 = jnp.tanh(h1 @ w2.T + b2)
    return h2 @ w3.T + b3


if __name__ == "__main__":
    # NL (num layers) is accepted by the torch module but unused by its forward.
    NL, NN = 4, 32
    B = 8                      # small batch of 1-D collocation points

    key = jax.random.PRNGKey(0)
    k_x, k_p = jax.random.split(key)
    x = jax.random.uniform(k_x, (B, 1), jnp.float32)
    params = init_params(k_p, NN)

    out = jax.block_until_ready(net_forward(x, params))
    ref = reference_forward(x, params)

    assert out.shape == (B, 1)
    assert jnp.allclose(out, ref, atol=1e-5, rtol=1e-5)

    # TODO(synk): at production PINN scale, fuse the PDE-residual / autodiff
    # tangent pass into this kernel so the pallas_call overhead is amortized.
    print("KERNEL_OK")
</pallas_src>

<mosaic_0001>
module attributes {stable_mosaic.version = 11 : i64} {
  func.func @mlp_kernel(%arg0: i32, %arg1: memref<1x128xf32, #tpu.memory_space<vmem>>, %arg2: memref<32x4xf32, #tpu.memory_space<vmem>>, %arg3: memref<16x32xf32, #tpu.memory_space<vmem>>, %arg4: memref<1x1xf32, #tpu.memory_space<smem>>, %arg5: memref<1x128xf32, #tpu.memory_space<vmem>>) attributes {dimension_semantics = [#tpu.dimension_semantics<parallel>], iteration_bounds = array<i64: 1>, scalar_prefetch = 0 : i64, scratch_operands = 0 : i64, tpu.core_type = #tpu.core_type<tc>, window_params = [{transform_indices = @transform_0, window_bounds = array<i64: 1, 128>}, {pipeline_mode = #tpu.pipeline_mode<synchronous>, transform_indices = @transform_1, window_bounds = array<i64: 32, 4>}, {pipeline_mode = #tpu.pipeline_mode<synchronous>, transform_indices = @transform_2, window_bounds = array<i64: 16, 32>}, {transform_indices = @transform_3, window_bounds = array<i64: 1, 1>}, {transform_indices = @transform_4, window_bounds = array<i64: 1, 128>}]} {
    %c0 = arith.constant 0 : index
    %c0_0 = arith.constant 0 : index
    %0 = vector.load %arg1[%c0, %c0_0] : memref<1x128xf32, #tpu.memory_space<vmem>>, vector<1x128xf32>
    %c0_1 = arith.constant 0 : index
    %c0_2 = arith.constant 0 : index
    %1 = vector.load %arg2[%c0_1, %c0_2] : memref<32x4xf32, #tpu.memory_space<vmem>>, vector<32x4xf32>
    %2 = vector.extract_strided_slice %1 {offsets = [0, 0], sizes = [32, 1], strides = [1, 1]} : vector<32x4xf32> to vector<32x1xf32>
    %3 = vector.extract_strided_slice %1 {offsets = [0, 1], sizes = [32, 1], strides = [1, 1]} : vector<32x4xf32> to vector<32x1xf32>
    %4 = vector.extract_strided_slice %1 {offsets = [0, 2], sizes = [16, 1], strides = [1, 1]} : vector<32x4xf32> to vector<16x1xf32>
    %5 = vector.extract_strided_slice %1 {offsets = [0, 3], sizes = [16, 1], strides = [1, 1]} : vector<32x4xf32> to vector<16x1xf32>
    %6 = vector.broadcast %2 : vector<32x1xf32> to vector<32x128xf32>
    %7 = vector.broadcast %0 : vector<1x128xf32> to vector<32x128xf32>
    %8 = arith.mulf %6, %7 : vector<32x128xf32>
    %9 = vector.broadcast %3 : vector<32x1xf32> to vector<32x128xf32>
    %10 = arith.addf %8, %9 : vector<32x128xf32>
    %11 = math.tanh %10 : vector<32x128xf32>
    %c0_3 = arith.constant 0 : index
    %c0_4 = arith.constant 0 : index
    %12 = vector.load %arg3[%c0_3, %c0_4] : memref<16x32xf32, #tpu.memory_space<vmem>>, vector<16x32xf32>
    %cst = arith.constant dense<0.000000e+00> : vector<16x128xf32>
    %13 = tpu.matmul %12, %11, %cst {dimension_numbers = #tpu.dot_dimension_numbers<[1], [0], [0], [1], [0, 0, 1, 1], [], []>} : vector<16x32xf32>, vector<32x128xf32>, vector<16x128xf32> -> vector<16x128xf32>
    %14 = vector.broadcast %4 : vector<16x1xf32> to vector<16x128xf32>
    %15 = arith.addf %13, %14 : vector<16x128xf32>
    %16 = math.tanh %15 : vector<16x128xf32>
    %17 = vector.broadcast %5 : vector<16x1xf32> to vector<16x128xf32>
    %18 = arith.mulf %17, %16 : vector<16x128xf32>
    %cst_5 = arith.constant dense<0.000000e+00> : vector<128xf32>
    %19 = vector.multi_reduction <add>, %18, %cst_5 [0] : vector<16x128xf32> to vector<128xf32>
    %20 = vector.shape_cast %19 : vector<128xf32> to vector<1x128xf32>
    %c0_6 = arith.constant 0 : index
    %c0_7 = arith.constant 0 : index
    %21 = memref.load %arg4[%c0_6, %c0_7] : memref<1x1xf32, #tpu.memory_space<smem>>
    %22 = vector.broadcast %21 : f32 to vector<1x128xf32>
    %23 = arith.addf %20, %22 : vector<1x128xf32>
    %c0_8 = arith.constant 0 : index
    %c0_9 = arith.constant 0 : index
    %24 = vector.load %arg5[%c0_8, %c0_9] : memref<1x128xf32, #tpu.memory_space<vmem>>, vector<1x128xf32>
    tpu.vector_store %arg5[%c0_8, %c0_9], %23 {strides = array<i32>} : memref<1x128xf32, #tpu.memory_space<vmem>>, vector<1x128xf32>,
    return
  }
  func.func @transform_0(%arg0: i32) -> (i32, i32) {
    %c0_i32 = arith.constant 0 : i32
    %c0_i32_0 = arith.constant 0 : i32
    return %c0_i32, %arg0 : i32, i32
  }
  func.func @transform_1(%arg0: i32) -> (i32, i32) {
    %c0_i32 = arith.constant 0 : i32
    %c0_i32_0 = arith.constant 0 : i32
    %c0_i32_1 = arith.constant 0 : i32
    return %c0_i32, %c0_i32_0 : i32, i32
  }
  func.func @transform_2(%arg0: i32) -> (i32, i32) {
    %c0_i32 = arith.constant 0 : i32
    %c0_i32_0 = arith.constant 0 : i32
    %c0_i32_1 = arith.constant 0 : i32
    return %c0_i32, %c0_i32_0 : i32, i32
  }
  func.func @transform_3(%arg0: i32) -> (i32, i32) {
    %c0_i32 = arith.constant 0 : i32
    %c0_i32_0 = arith.constant 0 : i32
    %c0_i32_1 = arith.constant 0 : i32
    return %c0_i32, %c0_i32_0 : i32, i32
  }
  func.func @transform_4(%arg0: i32) -> (i32, i32) {
    %c0_i32 = arith.constant 0 : i32
    %c0_i32_0 = arith.constant 0 : i32
    return %c0_i32, %arg0 : i32, i32
  }
}

</mosaic_0001>

<llo_original>
// kernel: tpu_custom_call.1
$region0: #{tpu_custom_call.1}
  #allocation0 [shape = 'u32[]', space=smem, size = 0x4, offset = 0x4, fixed_abs, tag = 'smem constant byte address 0x4 - core index']
  #allocation1 [shape = 'u32[72,128]{1,0:T(1,128)}', space=vmem, size = 0x9000, scoped, tag = 'internal scratch']
  #allocation2 [shape = 'f32[1,1]{1,0:T(1,128)S(6)}', space=smem, size = 0x200, scoped, tag = 'scoped memory for tpu_custom_call.1']
  %s0 = inlined_call_operand.vmem [shape: f32[1,128], index: 0, kind: input, shape index: {}]
  %s1 = inlined_call_operand.vmem [shape: f32[32,4], index: 1, kind: input, shape index: {}]
  %s2 = inlined_call_operand.vmem [shape: f32[16,32], index: 2, kind: input, shape index: {}]
  %s3 = inlined_call_operand.<no memory space> [shape: f32[1,1], index: 3, kind: input, shape index: {}]
  %s4 = inlined_call_operand.hbm [shape: f32[1,128], index: 4, kind: output, shape index: {}]
  %s5 = sld [smem:[#allocation0]]
  $region26: #{tpu_custom_call.1} parent=0
    _
  %s7 = ssub.s32 1, %s5
  %s8 = scalar_select 0, %s7, %s5
  %9 = sst [smem:[#allocation2]] %s3
  $region1: #{tpu_custom_call.1} parent=0
    #allocation3 [shape = 'u8[512]{0}', space=vmem, size = 0x400, scoped, tag = 'output window, operand 0, single buffered']
    #allocation4 [shape = 's32[1]{0}', space=sflag, size = 0x4, scoped, tag = 'scoped memory for tpu_custom_call.1']
    %10 = vsyncpa [#allocation4], 0
    // Predicated region
    $region2: #{tpu_custom_call.1} parent=1 // pred_check
      _
    $region3: #{tpu_custom_call.1} parent=1 // pred_check_branch
      %12 = sbr.rel (0) target = $region5
    $region4: #{tpu_custom_call.1} parent=1 // pred_region
      _
    $region5: #{tpu_custom_call.1} parent=1 // pred_fallthru
      _
    // Predicated region
    $region6: #{tpu_custom_call.1} parent=1 // pred_check
      _
    $region7: #{tpu_custom_call.1} parent=1 // pred_check_branch
      %14 = sbr.rel (0) target = $region9
    $region8: #{tpu_custom_call.1} parent=1 // pred_region
      _
    $region9: #{tpu_custom_call.1} parent=1 // pred_fallthru
      _
    // Predicated region
    $region10: #{tpu_custom_call.1} parent=1 // pred_check
      _
    $region11: #{tpu_custom_call.1} parent=1 // pred_check_branch
      %16 = sbr.rel (0) target = $region13
    $region12: #{tpu_custom_call.1} parent=1 // pred_region
      _
    $region13: #{tpu_custom_call.1} parent=1 // pred_fallthru
      _
    // Predicated region
    $region14: #{tpu_custom_call.1} parent=1 // pred_check
      _
    $region15: #{tpu_custom_call.1} parent=1 // pred_check_branch
      %18 = sbr.rel (0) target = $region17
    $region16: #{tpu_custom_call.1} parent=1 // pred_region
      _
    $region17: #{tpu_custom_call.1} parent=1 // pred_fallthru
      _
    %v19 = vld [vmem:[%s0] sm:$0x1]
    %v20 = vld [vmem:[%s1] sm:$0xff]
    %v21 = vld [vmem:[%s1 + $0x8] sm:$0xff]
    %v22 = vld [vmem:[%s1 + $0x10] sm:$0xff]
    %v23 = vld [vmem:[%s1 + $0x18] sm:$0xff]
    %25 = vset.pattern.permute.xlu0 0
    %26 = vperm.xlu0 %25, %v20
    %v27 = vpop.permute.xlu0 %26
    %30 = vset.pattern.permute.xlu0 0
    %31 = vperm.xlu0 %30, %v21
    %v32 = vpop.permute.xlu0 %31
    %35 = vset.pattern.permute.xlu0 0
    %36 = vperm.xlu0 %35, %v22
    %v37 = vpop.permute.xlu0 %36
    %40 = vset.pattern.permute.xlu0 0
    %41 = vperm.xlu0 %40, %v23
    %v42 = vpop.permute.xlu0 %41
    %v45 = vperm.slane %v19, 0
    %v47 = vmul.f32 %v27, %v45
    %v48 = vmul.f32 %v32, %v45
    %v49 = vmul.f32 %v37, %v45
    %v50 = vmul.f32 %v42, %v45
    %51 = vset.pattern.permute.xlu0 1
    %52 = vperm.xlu0 %51, %v20
    %v53 = vpop.permute.xlu0 %52
    %55 = vset.pattern.permute.xlu0 1
    %56 = vperm.xlu0 %55, %v21
    %v57 = vpop.permute.xlu0 %56
    %59 = vset.pattern.permute.xlu0 1
    %60 = vperm.xlu0 %59, %v22
    %v61 = vpop.permute.xlu0 %60
    %63 = vset.pattern.permute.xlu0 1
    %64 = vperm.xlu0 %63, %v23
    %v65 = vpop.permute.xlu0 %64
    %v67 = vadd.f32 %v47, %v53
    %v68 = vadd.f32 %v48, %v57
    %v69 = vadd.f32 %v49, %v61
    %v70 = vadd.f32 %v50, %v65
    %v71 = vtanh.pop %v67
    %v72 = vtanh.pop %v68
    %v73 = vtanh.pop %v69
    %v74 = vtanh.pop %v70
    %v75 = vld [vmem:[%s2] sm:$0xff]
    %v76 = vld [vmem:[%s2 + $0x8] sm:$0xff]
    %77 = vset.pattern.permute.xlu0 2
    %78 = vperm.xlu0 %77, %v20
    %v79 = vpop.permute.xlu0 %78
    %81 = vset.pattern.permute.xlu0 2
    %82 = vperm.xlu0 %81, %v21
    %v83 = vpop.permute.xlu0 %82
    %vm85 = vcmask 261120
    %v87 = vsel %vm85, %v75, 0
    %v90 = vsel %vm85, %v76, 0
    %92 = vmatpush.msra.mxu0 0.0
    %93 = vmatpush.msra.mxu0 0.0
    %94 = vmatpush.msra.mxu0 0.0
    %95 = vmatpush.msra.mxu0 0.0
    %96 = vmatpush.msra.mxu0 0.0
    %97 = vmatpush.msra.mxu0 0.0
    %98 = vmatpush.msra.mxu0 0.0
    %99 = vmatpush.msra.mxu0 0.0
    %100 = vmatpush.msra.mxu0 0.0
    %101 = vmatpush.msra.mxu0 0.0
    %102 = vmatpush.msra.mxu0 0.0
    %103 = vmatpush.msra.mxu0 0.0
    %104 = vmatpush.msra.mxu0 %v74
    %105 = vmatpush.msra.mxu0 %v73
    %106 = vmatpush.msra.mxu0 %v72
    %107 = vmatpush.msra.mxu0 %v71
    %108 = vmatmul.f32.gmra.mxu0 %v87
    %v109 = vpop.f32.mrf.mxu0
    %v110 = vadd.f32 %v79, %v109
    %111 = vmatmul.f32.gmra.mxu0 %v90
    %v112 = vpop.f32.mrf.mxu0
    %v113 = vadd.f32 %v83, %v112
    %114 = vdwg.mxu0
    %v115 = vtanh.pop %v110
    %v116 = vtanh.pop %v113
    %117 = vset.pattern.permute.xlu0 3
    %118 = vperm.xlu0 %117, %v20
    %v119 = vpop.permute.xlu0 %118
    %121 = vset.pattern.permute.xlu0 3
    %122 = vperm.xlu0 %121, %v21
    %v123 = vpop.permute.xlu0 %122
    %v125 = vmul.f32 %v119, %v115
    %v126 = vmul.f32 %v123, %v116
    %v127 = vadd.f32 %v125, %v126
    %v128 = vrot.slane %v127, 4
    %v129 = vadd.f32 %v127, %v128
    %v130 = vrot.slane %v129, 2
    %v131 = vadd.f32 %v129, %v130
    %v132 = vrot.slane %v131, 1
    %v133 = vadd.f32 %v131, %v132
    %s134 = sld [smem:[#allocation2]]
    %v135 = vstv %s134
    %v136 = vadd.f32 %v133, %v135
    %137 = vst [vmem:[#allocation3] sm:$0x1] %v136
    // Predicated region
    $region18: #{tpu_custom_call.1} parent=1 // pred_check
      _
    $region19: #{tpu_custom_call.1} parent=1 // pred_check_branch
      %139 = sbr.rel (0) target = $region21
    $region20: #{tpu_custom_call.1} parent=1 // pred_region
      %141 = vsyncadd [#allocation4], 0
      %s143 = sshll.u32 [#allocation3], 4
      %s144 = int_to_ptr.vmem [resolvable:$true] %s143
      %s145 = sshll.u32 %s4, 4
      %s146 = int_to_ptr.hbm [resolvable:$true] %s145
      %148 = dma.vmem_to_hbm [thread:$0]  %s144, 16, %s146, [#allocation4]
    $region21: #{tpu_custom_call.1} parent=1 // pred_fallthru
      _
    // Predicated region
    $region22: #{tpu_custom_call.1} parent=1 // pred_check
      _
    $region23: #{tpu_custom_call.1} parent=1 // pred_check_branch
      %150 = sbr.rel (0) target = $region25
    $region24: #{tpu_custom_call.1} parent=1 // pred_region
      %152 = dma.done [#allocation4], 16
    $region25: #{tpu_custom_call.1} parent=1 // pred_fallthru
      _
    %153 = vsyncpa [#allocation4], 1

</llo_original>
